<compile_context>
chip_gen: v5e
topology: v5e:2x2
jax: 0.10.0
libtpu: 0.0.40
codegen_flags: <defaults>
</compile_context>

<pallas_src>
import jax
import jax.numpy as jnp
from jax.experimental import pallas as pl
from jax.experimental.pallas import tpu as pltpu


def _round_up(x, m):
    return (x + m - 1) // m * m


def critic_kernel(xa_ref, w1_ref, b1_ref, w2_ref, b2_ref, w3_ref, b3_ref, out_ref):
    # layer 1: fused fc11 + fc12 -> one MXU matmul over the real contraction
    # dim (S+A); Mosaic masks the unaligned K internally.
    h1 = jnp.dot(xa_ref[...], w1_ref[...], preferred_element_type=jnp.float32)
    h1 = jnp.maximum(h1 + b1_ref[...], 0.0)                       # f32 bias/relu
    # layer 2: the only big matmul (K = H1p, N = H2p), MXU-aligned.
    h2 = jnp.dot(h1.astype(w2_ref.dtype), w2_ref[...],
                 preferred_element_type=jnp.float32)
    h2 = jnp.maximum(h2 + b2_ref[...], 0.0)                       # f32
    # layer 3: width-1 head -> VPU multiply + lane reduction, then one small
    # XLU transpose into a lane-dense (1, TB) output row; b3 folded in here.
    q = jnp.sum(h2 * w3_ref[...], axis=-1, keepdims=True)         # (TB, 1)
    out_ref[...] = (q.T + b3_ref[0, 0]).astype(out_ref.dtype)     # (1, TB)


def init_critic_params(key, nb_states, nb_actions, hidden1=400, hidden2=300):
    """Deterministic init mimicking nn.Linear default U(-1/sqrt(fan_in), +)."""
    ks = jax.random.split(key, 8)

    def linear(kw, kb, fan_in, fan_out):
        bound = 1.0 / jnp.sqrt(jnp.float32(fan_in))
        # stored as [in, out] (transposed vs. PyTorch's [out, in])
        w = jax.random.uniform(kw, (fan_in, fan_out), jnp.float32, -bound, bound)
        b = jax.random.uniform(kb, (fan_out,), jnp.float32, -bound, bound)
        return w, b

    w11, b11 = linear(ks[0], ks[1], nb_states, hidden1)
    w12, b12 = linear(ks[2], ks[3], nb_actions, hidden1)
    w2, b2 = linear(ks[4], ks[5], hidden1, hidden2)
    w3, b3 = linear(ks[6], ks[7], hidden2, 1)
    return (w11, b11, w12, b12, w2, b2, w3, b3)


def prepare_critic_params(params, compute_dtype=jnp.bfloat16):
    """One-time padding / stacking / dtype cast of the weights.

    Call this ONCE (e.g. right after init / load) and reuse the result for
    every forward call.  Only the hidden (output) dims are padded to 128;
    the layer-1 contraction dim stays at its real size S+A.
    """
    w11, b11, w12, b12, w2, b2, w3, b3 = params
    S, H1 = w11.shape
    A = w12.shape[0]
    H2 = w2.shape[1]

    H1p = _round_up(H1, 128)
    H2p = _round_up(H2, 128)
    f32 = jnp.float32

    def pad2(m, r, c, dt):
        return jnp.pad(m.astype(dt), ((0, r - m.shape[0]), (0, c - m.shape[1])))

    def padrow(v, c):
        return jnp.pad(v.astype(f32), (0, c - v.shape[0])).reshape(1, c)

    w1 = jnp.concatenate([w11, w12], axis=0)          # [(S+A), H1]
    w1p = pad2(w1, S + A, H1p, compute_dtype)         # contraction dim unpadded
    b1p = padrow(b11 + b12, H1p)                      # fused fc11+fc12 bias (f32)
    w2p = pad2(w2, H1p, H2p, compute_dtype)
    b2p = padrow(b2, H2p)
    w3row = padrow(w3[:, 0], H2p)                     # fc3 weights as (1, H2p) f32 row
    b3s = b3.astype(f32).reshape(1, 1)                # (1,1) scalar for SMEM
    return (w1p, b1p, w2p, b2p, w3row, b3s)


@jax.jit
def critic_forward(x, a, prepared):
    """x: [B, nb_states], a: [B, nb_actions] -> [B, 1] (float32)."""
    w1p, b1p, w2p, b2p, w3row, b3s = prepared
    B, S = x.shape
    _, A = a.shape
    C, H1p = w1p.shape                    # C = S + A (real contraction dim)
    H2p = w2p.shape[1]
    compute_dtype = w1p.dtype

    # Batch tiling:
    #  * B <= 128: one full-array tile (step overhead dominates anyway).
    #  * larger B: >=2 grid steps (the "parallel" batch axis shards them
    #    across both v7x TensorCores), TB a multiple of 128 (keeps the
    #    lane-dense (1, TB) output block legal), capped at 512 rows/step.
    Bp8 = _round_up(B, 8)
    if Bp8 <= 128:
        TB = Bp8
    else:
        TB = min(512, max(128, _round_up(-(-Bp8 // 2), 128)))
    Bp = _round_up(B, TB)
    grid = (Bp // TB,)

    xa = jnp.concatenate([x, a], axis=1).astype(compute_dtype)     # (B, C)
    if Bp != B:
        xa = jnp.pad(xa, ((0, Bp - B), (0, 0)))

    wbytes = w1p.dtype.itemsize
    cost = pl.CostEstimate(
        flops=2 * Bp * (C * H1p + H1p * H2p + H2p),
        transcendentals=0,
        bytes_accessed=(Bp * C * wbytes                  # [x||a]
                        + (C * H1p + H1p * H2p) * wbytes  # W1, W2
                        + (2 * H1p + 2 * H2p + 1) * 4     # biases + w3 row + b3
                        + Bp * 4),                        # lane-dense output
    )

    inv = lambda r, c: pl.BlockSpec((r, c), lambda i: (0, 0))   # grid-invariant block

    out_row = pl.pallas_call(
        critic_kernel,
        out_shape=jax.ShapeDtypeStruct((1, Bp), jnp.float32),
        grid_spec=pltpu.PrefetchScalarGridSpec(
            num_scalar_prefetch=0,
            grid=grid,
            in_specs=[
                pl.BlockSpec((TB, C), lambda i: (i, 0)),        # [x || a] batch tile
                inv(C, H1p),                                    # W1 = [W11; W12]
                inv(1, H1p),                                    # b1 = b11 + b12
                inv(H1p, H2p),                                  # W2
                inv(1, H2p),                                    # b2
                inv(1, H2p),                                    # w3 row
                pl.BlockSpec(memory_space=pltpu.MemorySpace.SMEM),  # b3 scalar
            ],
            out_specs=pl.BlockSpec((1, TB), lambda i: (0, i)),  # lane-dense row
        ),
        compiler_params=pltpu.CompilerParams(
            dimension_semantics=("parallel",)),
        cost_estimate=cost,
    )(xa, w1p, b1p, w2p, b2p, w3row, b3s)

    # TODO(synk): for tiny batches (B <= ~32) the call is dispatch-bound; a
    # plain XLA fallback path could be used there if end-to-end latency matters.
    return out_row[0, :B].reshape(B, 1)


def critic_reference(x, a, params):
    w11, b11, w12, b12, w2, b2, w3, b3 = params
    out = jnp.maximum(x @ w11 + b11 + a @ w12 + b12, 0.0)
    out = jnp.maximum(out @ w2 + b2, 0.0)
    return out @ w3 + b3


if __name__ == "__main__":
    B, NB_STATES, NB_ACTIONS = 2, 16, 4
    HIDDEN1, HIDDEN2 = 400, 300

    key = jax.random.PRNGKey(0)
    kx, ka, kp = jax.random.split(key, 3)
    x = jax.random.normal(kx, (B, NB_STATES), jnp.float32)
    a = jax.random.normal(ka, (B, NB_ACTIONS), jnp.float32)
    params = init_critic_params(kp, NB_STATES, NB_ACTIONS, HIDDEN1, HIDDEN2)
    ref = critic_reference(x, a, params)

    # f32 compute path: exact check of kernel / fusion / padding / tiling.
    prep_f32 = prepare_critic_params(params, compute_dtype=jnp.float32)
    out_f32 = critic_forward(x, a, prep_f32)
    jax.block_until_ready(out_f32)
    assert out_f32.shape == (B, 1), out_f32.shape
    assert jnp.allclose(out_f32, ref, atol=1e-4, rtol=1e-4), (out_f32, ref)

    # bf16 weight/activation path (f32 accumulation, f32 elementwise math).
    prep_bf16 = prepare_critic_params(params, compute_dtype=jnp.bfloat16)
    out_bf16 = critic_forward(x, a, prep_bf16)
    jax.block_until_ready(out_bf16)
    assert out_bf16.shape == (B, 1), out_bf16.shape
    assert jnp.allclose(out_bf16, ref, atol=5e-2, rtol=5e-2), (out_bf16, ref)

    # Larger batch: multi-step grid (2 steps of 128 rows), exercises the
    # "parallel" batch axis and the lane-dense multi-block output.
    BL = 200
    xl = jax.random.normal(kx, (BL, NB_STATES), jnp.float32)
    al = jax.random.normal(ka, (BL, NB_ACTIONS), jnp.float32)
    out_l = critic_forward(xl, al, prep_f32)
    jax.block_until_ready(out_l)
    refl = critic_reference(xl, al, params)
    assert out_l.shape == (BL, 1), out_l.shape
    assert jnp.allclose(out_l, refl, atol=1e-4, rtol=1e-4)

    print("KERNEL_OK")
</pallas_src>

<mosaic_0001>
module attributes {stable_mosaic.version = 11 : i64} {
  func.func @critic_kernel(%arg0: i32, %arg1: memref<8x20xf32, #tpu.memory_space<vmem>>, %arg2: memref<20x512xf32, #tpu.memory_space<vmem>>, %arg3: memref<1x512xf32, #tpu.memory_space<vmem>>, %arg4: memref<512x384xf32, #tpu.memory_space<vmem>>, %arg5: memref<1x384xf32, #tpu.memory_space<vmem>>, %arg6: memref<1x384xf32, #tpu.memory_space<vmem>>, %arg7: memref<1x1xf32, #tpu.memory_space<smem>>, %arg8: memref<1x8xf32, #tpu.memory_space<vmem>>) attributes {dimension_semantics = [#tpu.dimension_semantics<parallel>], iteration_bounds = array<i64: 1>, scalar_prefetch = 0 : i64, scratch_operands = 0 : i64, tpu.core_type = #tpu.core_type<tc>, window_params = [{transform_indices = @transform_0, window_bounds = array<i64: 8, 20>}, {pipeline_mode = #tpu.pipeline_mode<synchronous>, transform_indices = @transform_1, window_bounds = array<i64: 20, 512>}, {pipeline_mode = #tpu.pipeline_mode<synchronous>, transform_indices = @transform_2, window_bounds = array<i64: 1, 512>}, {pipeline_mode = #tpu.pipeline_mode<synchronous>, transform_indices = @transform_3, window_bounds = array<i64: 512, 384>}, {pipeline_mode = #tpu.pipeline_mode<synchronous>, transform_indices = @transform_4, window_bounds = array<i64: 1, 384>}, {pipeline_mode = #tpu.pipeline_mode<synchronous>, transform_indices = @transform_5, window_bounds = array<i64: 1, 384>}, {transform_indices = @transform_6, window_bounds = array<i64: 1, 1>}, {transform_indices = @transform_7, window_bounds = array<i64: 1, 8>}]} {
    %c0 = arith.constant 0 : index
    %c0_0 = arith.constant 0 : index
    %0 = vector.load %arg1[%c0, %c0_0] : memref<8x20xf32, #tpu.memory_space<vmem>>, vector<8x20xf32>
    %c0_1 = arith.constant 0 : index
    %c0_2 = arith.constant 0 : index
    %1 = vector.load %arg2[%c0_1, %c0_2] : memref<20x512xf32, #tpu.memory_space<vmem>>, vector<20x512xf32>
    %cst = arith.constant dense<0.000000e+00> : vector<8x512xf32>
    %2 = tpu.matmul %0, %1, %cst {dimension_numbers = #tpu.dot_dimension_numbers<[1], [0], [0], [1], [0, 0, 1, 1], [], []>} : vector<8x20xf32>, vector<20x512xf32>, vector<8x512xf32> -> vector<8x512xf32>
    %c0_3 = arith.constant 0 : index
    %c0_4 = arith.constant 0 : index
    %3 = vector.load %arg3[%c0_3, %c0_4] : memref<1x512xf32, #tpu.memory_space<vmem>>, vector<1x512xf32>
    %4 = vector.broadcast %3 : vector<1x512xf32> to vector<8x512xf32>
    %5 = arith.addf %2, %4 : vector<8x512xf32>
    %cst_5 = arith.constant 0.000000e+00 : f32
    %6 = vector.broadcast %cst_5 : f32 to vector<8x512xf32>
    %7 = arith.maximumf %5, %6 : vector<8x512xf32>
    %c0_6 = arith.constant 0 : index
    %c0_7 = arith.constant 0 : index
    %8 = vector.load %arg4[%c0_6, %c0_7] : memref<512x384xf32, #tpu.memory_space<vmem>>, vector<512x384xf32>
    %cst_8 = arith.constant dense<0.000000e+00> : vector<8x384xf32>
    %9 = tpu.matmul %7, %8, %cst_8 {dimension_numbers = #tpu.dot_dimension_numbers<[1], [0], [0], [1], [0, 0, 1, 1], [], []>} : vector<8x512xf32>, vector<512x384xf32>, vector<8x384xf32> -> vector<8x384xf32>
    %c0_9 = arith.constant 0 : index
    %c0_10 = arith.constant 0 : index
    %10 = vector.load %arg5[%c0_9, %c0_10] : memref<1x384xf32, #tpu.memory_space<vmem>>, vector<1x384xf32>
    %11 = vector.broadcast %10 : vector<1x384xf32> to vector<8x384xf32>
    %12 = arith.addf %9, %11 : vector<8x384xf32>
    %cst_11 = arith.constant 0.000000e+00 : f32
    %13 = vector.broadcast %cst_11 : f32 to vector<8x384xf32>
    %14 = arith.maximumf %12, %13 : vector<8x384xf32>
    %c0_12 = arith.constant 0 : index
    %c0_13 = arith.constant 0 : index
    %15 = vector.load %arg6[%c0_12, %c0_13] : memref<1x384xf32, #tpu.memory_space<vmem>>, vector<1x384xf32>
    %16 = vector.broadcast %15 : vector<1x384xf32> to vector<8x384xf32>
    %17 = arith.mulf %14, %16 : vector<8x384xf32>
    %cst_14 = arith.constant dense<0.000000e+00> : vector<8xf32>
    %18 = vector.multi_reduction <add>, %17, %cst_14 [1] : vector<8x384xf32> to vector<8xf32>
    %19 = vector.shape_cast %18 : vector<8xf32> to vector<8x1xf32>
    %20 = tpu.transpose %19, [1, 0] : vector<8x1xf32> -> vector<1x8xf32>
    %c0_15 = arith.constant 0 : index
    %c0_16 = arith.constant 0 : index
    %21 = memref.load %arg7[%c0_15, %c0_16] : memref<1x1xf32, #tpu.memory_space<smem>>
    %22 = vector.broadcast %21 : f32 to vector<1x8xf32>
    %23 = arith.addf %20, %22 : vector<1x8xf32>
    %c0_17 = arith.constant 0 : index
    %c0_18 = arith.constant 0 : index
    %24 = vector.load %arg8[%c0_17, %c0_18] : memref<1x8xf32, #tpu.memory_space<vmem>>, vector<1x8xf32>
    tpu.vector_store %arg8[%c0_17, %c0_18], %23 {strides = array<i32>} : memref<1x8xf32, #tpu.memory_space<vmem>>, vector<1x8xf32>,
    return
  }
  func.func @transform_0(%arg0: i32) -> (i32, i32) {
    %c0_i32 = arith.constant 0 : i32
    %c0_i32_0 = arith.constant 0 : i32
    return %arg0, %c0_i32 : i32, i32
  }
  func.func @transform_1(%arg0: i32) -> (i32, i32) {
    %c0_i32 = arith.constant 0 : i32
    %c0_i32_0 = arith.constant 0 : i32
    %c0_i32_1 = arith.constant 0 : i32
    return %c0_i32, %c0_i32_0 : i32, i32
  }
  func.func @transform_2(%arg0: i32) -> (i32, i32) {
    %c0_i32 = arith.constant 0 : i32
    %c0_i32_0 = arith.constant 0 : i32
    %c0_i32_1 = arith.constant 0 : i32
    return %c0_i32, %c0_i32_0 : i32, i32
  }
  func.func @transform_3(%arg0: i32) -> (i32, i32) {
    %c0_i32 = arith.constant 0 : i32
    %c0_i32_0 = arith.constant 0 : i32
    %c0_i32_1 = arith.constant 0 : i32
    return %c0_i32, %c0_i32_0 : i32, i32
  }
  func.func @transform_4(%arg0: i32) -> (i32, i32) {
    %c0_i32 = arith.constant 0 : i32
    %c0_i32_0 = arith.constant 0 : i32
    %c0_i32_1 = arith.constant 0 : i32
    return %c0_i32, %c0_i32_0 : i32, i32
  }
  func.func @transform_5(%arg0: i32) -> (i32, i32) {
    %c0_i32 = arith.constant 0 : i32
    %c0_i32_0 = arith.constant 0 : i32
    %c0_i32_1 = arith.constant 0 : i32
    return %c0_i32, %c0_i32_0 : i32, i32
  }
  func.func @transform_6(%arg0: i32) -> (i32, i32) {
    %c0_i32 = arith.constant 0 : i32
    %c0_i32_0 = arith.constant 0 : i32
    %c0_i32_1 = arith.constant 0 : i32
    return %c0_i32, %c0_i32_0 : i32, i32
  }
  func.func @transform_7(%arg0: i32) -> (i32, i32) {
    %c0_i32 = arith.constant 0 : i32
    %c0_i32_0 = arith.constant 0 : i32
    return %c0_i32, %arg0 : i32, i32
  }
}

</mosaic_0001>

<llo_original>
// kernel: critic_forward.1
$region0: #{critic_forward.1}
  #allocation0 [shape = 'u32[]', space=smem, size = 0x4, offset = 0x4, fixed_abs, tag = 'smem constant byte address 0x4 - core index']
  #allocation1 [shape = 'u32[72,128]{1,0:T(1,128)}', space=vmem, size = 0x9000, scoped, tag = 'internal scratch']
  #allocation2 [shape = 'f32[1,1]{1,0:T(1,128)S(6)}', space=smem, size = 0x200, scoped, tag = 'scoped memory for critic_forward.1']
  %s0 = inlined_call_operand.vmem [shape: f32[8,20], index: 0, kind: input, shape index: {}]
  %s1 = inlined_call_operand.hbm [shape: f32[20,512], index: 1, kind: input, shape index: {}]
  %s2 = inlined_call_operand.vmem [shape: f32[1,512], index: 2, kind: input, shape index: {}]
  %s3 = inlined_call_operand.hbm [shape: f32[512,384], index: 3, kind: input, shape index: {}]
  %s4 = inlined_call_operand.vmem [shape: f32[1,384], index: 4, kind: input, shape index: {}]
  %s5 = inlined_call_operand.vmem [shape: f32[1,384], index: 5, kind: input, shape index: {}]
  %s6 = inlined_call_operand.<no memory space> [shape: f32[1,1], index: 6, kind: input, shape index: {}]
  %s7 = inlined_call_operand.vmem [shape: f32[1,8], index: 7, kind: output, shape index: {}]
  %s8 = sld [smem:[#allocation0]]
  $region46: #{critic_forward.1} parent=0
    _
  %s10 = ssub.s32 1, %s8
  %s11 = scalar_select 0, %s10, %s8
  %12 = sst [smem:[#allocation2]] %s6
  $region1: #{critic_forward.1} parent=0
    #allocation3 [shape = 'u8[49152]{0}', space=vmem, size = 0xc000, scoped, tag = 'input window, operand 1, single buffered']
    #allocation4 [shape = 's32[1]{0}', space=sflag, size = 0x4, scoped, tag = 'scoped memory for critic_forward.1']
    #allocation5 [shape = 'u8[786432]{0}', space=vmem, size = 0xc0000, scoped, tag = 'input window, operand 3, single buffered']
    #allocation6 [shape = 's32[1]{0}', space=sflag, size = 0x4, scoped, tag = 'scoped memory for critic_forward.1']
    %13 = vsyncpa [#allocation4], 0
    %14 = vsyncpa [#allocation6], 0
    // Predicated region
    $region2: #{critic_forward.1} parent=1 // pred_check
      _
    $region3: #{critic_forward.1} parent=1 // pred_check_branch
      %16 = sbr.rel (0) target = $region5
    $region4: #{critic_forward.1} parent=1 // pred_region
      _
    $region5: #{critic_forward.1} parent=1 // pred_fallthru
      _
    // Predicated region
    $region6: #{critic_forward.1} parent=1 // pred_check
      _
    $region7: #{critic_forward.1} parent=1 // pred_check_branch
      %18 = sbr.rel (0) target = $region9
    $region8: #{critic_forward.1} parent=1 // pred_region
      %20 = vsyncadd [#allocation4], 0
      %s21 = sshll.u32 %s1, 4
      %s22 = int_to_ptr.hbm [resolvable:$true] %s21
      %s23 = sshll.u32 [#allocation3], 4
      %s24 = int_to_ptr.vmem [resolvable:$true] %s23
      %29 = dma.hbm_to_vmem [thread:$0]  %s22, 1536, %s24, [#allocation4], 512, 512, 32
    $region9: #{critic_forward.1} parent=1 // pred_fallthru
      _
    // Predicated region
    $region10: #{critic_forward.1} parent=1 // pred_check
      _
    $region11: #{critic_forward.1} parent=1 // pred_check_branch
      %31 = sbr.rel (0) target = $region13
    $region12: #{critic_forward.1} parent=1 // pred_region
      _
    $region13: #{critic_forward.1} parent=1 // pred_fallthru
      _
    // Predicated region
    $region14: #{critic_forward.1} parent=1 // pred_check
      _
    $region15: #{critic_forward.1} parent=1 // pred_check_branch
      %33 = sbr.rel (0) target = $region17
    $region16: #{critic_forward.1} parent=1 // pred_region
      %35 = vsyncadd [#allocation6], 0
      %s36 = sshll.u32 %s3, 4
      %s37 = int_to_ptr.hbm [resolvable:$true] %s36
      %s38 = sshll.u32 [#allocation5], 4
      %s39 = int_to_ptr.vmem [resolvable:$true] %s38
      %44 = dma.hbm_to_vmem [thread:$0]  %s37, 24576, %s39, [#allocation6], 384, 384, 24
    $region17: #{critic_forward.1} parent=1 // pred_fallthru
      _
    // Predicated region
    $region18: #{critic_forward.1} parent=1 // pred_check
      _
    $region19: #{critic_forward.1} parent=1 // pred_check_branch
      %46 = sbr.rel (0) target = $region21
    $region20: #{critic_forward.1} parent=1 // pred_region
      _
    $region21: #{critic_forward.1} parent=1 // pred_fallthru
      _
    // Predicated region
    $region22: #{critic_forward.1} parent=1 // pred_check
      _
    $region23: #{critic_forward.1} parent=1 // pred_check_branch
      %48 = sbr.rel (0) target = $region25
    $region24: #{critic_forward.1} parent=1 // pred_region
      _
    $region25: #{critic_forward.1} parent=1 // pred_fallthru
      _
    // Predicated region
    $region26: #{critic_forward.1} parent=1 // pred_check
      _
    $region27: #{critic_forward.1} parent=1 // pred_check_branch
      %50 = sbr.rel (0) target = $region29
    $region28: #{critic_forward.1} parent=1 // pred_region
      _
    $region29: #{critic_forward.1} parent=1 // pred_fallthru
      _
    // Predicated region
    $region30: #{critic_forward.1} parent=1 // pred_check
      _
    $region31: #{critic_forward.1} parent=1 // pred_check_branch
      %52 = sbr.rel (0) target = $region33
    $region32: #{critic_forward.1} parent=1 // pred_region
      %54 = dma.done [#allocation4], 1536
    $region33: #{critic_forward.1} parent=1 // pred_fallthru
      _
    // Predicated region
    $region34: #{critic_forward.1} parent=1 // pred_check
      _
    $region35: #{critic_forward.1} parent=1 // pred_check_branch
      %56 = sbr.rel (0) target = $region37
    $region36: #{critic_forward.1} parent=1 // pred_region
      %58 = dma.done [#allocation6], 24576
    $region37: #{critic_forward.1} parent=1 // pred_fallthru
      _
    %v59 = vld [vmem:[%s0] sm:$0xff]
    %v60 = vld [vmem:[#allocation3] sm:$0xff]
    %v61 = vld [vmem:[#allocation3 + $0x8] sm:$0xff]
    %v62 = vld [vmem:[#allocation3 + $0x10] sm:$0xff]
    %v63 = vld [vmem:[#allocation3 + $0x18] sm:$0xff]
    %v64 = vld [vmem:[#allocation3 + $0x20] sm:$0xff]
    %v65 = vld [vmem:[#allocation3 + $0x28] sm:$0xff]
    %v66 = vld [vmem:[#allocation3 + $0x30] sm:$0xff]
    %v67 = vld [vmem:[#allocation3 + $0x38] sm:$0xff]
    %v68 = vld [vmem:[#allocation3 + $0x40] sm:$0xf]
    %v69 = vld [vmem:[#allocation3 + $0x48] sm:$0xf]
    %v70 = vld [vmem:[#allocation3 + $0x50] sm:$0xf]
    %v71 = vld [vmem:[#allocation3 + $0x58] sm:$0xf]
    %v72 = vld [vmem:[%s2] sm:$0xf]
    %v74 = vperm.slane %v72, 0
    %v75 = vperm.slane %v72, 1
    %v76 = vperm.slane %v72, 2
    %v77 = vperm.slane %v72, 3
    %vm82 = vcmask 162816
    %v84 = vsel %vm82, %v59, 0
    %vm86 = vcmask 1043456
    %v88 = vsel %vm86, %v68, 0
    %v91 = vsel %vm86, %v69, 0
    %v94 = vsel %vm86, %v70, 0
    %v97 = vsel %vm86, %v71, 0
    %99 = vmatpush.msra.mxu0 0.0
    %100 = vmatpush.msra.mxu0 0.0
    %101 = vmatpush.msra.mxu0 0.0
    %102 = vmatpush.msra.mxu0 0.0
    %103 = vmatpush.msra.mxu0 0.0
    %104 = vmatpush.msra.mxu0 0.0
    %105 = vmatpush.msra.mxu0 0.0
    %106 = vmatpush.msra.mxu0 0.0
    %107 = vmatpush.msra.mxu0 0.0
    %108 = vmatpush.msra.mxu0 0.0
    %109 = vmatpush.msra.mxu0 0.0
    %110 = vmatpush.msra.mxu0 0.0
    %111 = vmatpush.msra.mxu0 0.0
    %112 = vmatpush.msra.mxu0 %v88
    %113 = vmatpush.msra.mxu0 %v64
    %114 = vmatpush.msra.mxu0 %v60
    %115 = vmatmul.f32.gmra.mxu0 %v84
    %v116 = vpop.f32.mrf.mxu0
    %v117 = vadd.f32 %v74, %v116
    %118 = vdwg.mxu0
    %119 = vmatpush.msra.mxu0 0.0
    %120 = vmatpush.msra.mxu0 0.0
    %121 = vmatpush.msra.mxu0 0.0
    %122 = vmatpush.msra.mxu0 0.0
    %123 = vmatpush.msra.mxu0 0.0
    %124 = vmatpush.msra.mxu0 0.0
    %125 = vmatpush.msra.mxu0 0.0
    %126 = vmatpush.msra.mxu0 0.0
    %127 = vmatpush.msra.mxu0 0.0
    %128 = vmatpush.msra.mxu0 0.0
    %129 = vmatpush.msra.mxu0 0.0
    %130 = vmatpush.msra.mxu0 0.0
    %131 = vmatpush.msra.mxu0 0.0
    %132 = vmatpush.msra.mxu0 %v91
    %133 = vmatpush.msra.mxu0 %v65
    %134 = vmatpush.msra.mxu0 %v61
    %135 = vmatmul.f32.gmra.mxu0 %v84
    %v136 = vpop.f32.mrf.mxu0
    %v137 = vadd.f32 %v75, %v136
    %138 = vdwg.mxu0
    %139 = vmatpush.msra.mxu0 0.0
    %140 = vmatpush.msra.mxu0 0.0
    %141 = vmatpush.msra.mxu0 0.0
    %142 = vmatpush.msra.mxu0 0.0
    %143 = vmatpush.msra.mxu0 0.0
    %144 = vmatpush.msra.mxu0 0.0
    %145 = vmatpush.msra.mxu0 0.0
    %146 = vmatpush.msra.mxu0 0.0
    %147 = vmatpush.msra.mxu0 0.0
    %148 = vmatpush.msra.mxu0 0.0
    %149 = vmatpush.msra.mxu0 0.0
    %150 = vmatpush.msra.mxu0 0.0
    %151 = vmatpush.msra.mxu0 0.0
    %152 = vmatpush.msra.mxu0 %v94
    %153 = vmatpush.msra.mxu0 %v66
    %154 = vmatpush.msra.mxu0 %v62
    %155 = vmatmul.f32.gmra.mxu0 %v84
    %v156 = vpop.f32.mrf.mxu0
    %v157 = vadd.f32 %v76, %v156
    %158 = vdwg.mxu0
    %159 = vmatpush.msra.mxu0 0.0
    %160 = vmatpush.msra.mxu0 0.0
    %161 = vmatpush.msra.mxu0 0.0
    %162 = vmatpush.msra.mxu0 0.0
    %163 = vmatpush.msra.mxu0 0.0
    %164 = vmatpush.msra.mxu0 0.0
    %165 = vmatpush.msra.mxu0 0.0
    %166 = vmatpush.msra.mxu0 0.0
    %167 = vmatpush.msra.mxu0 0.0
    %168 = vmatpush.msra.mxu0 0.0
    %169 = vmatpush.msra.mxu0 0.0
    %170 = vmatpush.msra.mxu0 0.0
    %171 = vmatpush.msra.mxu0 0.0
    %172 = vmatpush.msra.mxu0 %v97
    %173 = vmatpush.msra.mxu0 %v67
    %174 = vmatpush.msra.mxu0 %v63
    %175 = vmatmul.f32.gmra.mxu0 %v84
    %v176 = vpop.f32.mrf.mxu0
    %v177 = vadd.f32 %v77, %v176
    %178 = vdwg.mxu0
    %v179 = vmax.f32 %v117, 0.0
    %v180 = vmax.f32 %v137, 0.0
    %v181 = vmax.f32 %v157, 0.0
    %v182 = vmax.f32 %v177, 0.0
    %v183 = vld [vmem:[#allocation5] sm:$0xff]
    %v184 = vld [vmem:[#allocation5 + $0x8] sm:$0xff]
    %v185 = vld [vmem:[#allocation5 + $0x10] sm:$0xff]
    %v186 = vld [vmem:[#allocation5 + $0x18] sm:$0xff]
    %v187 = vld [vmem:[#allocation5 + $0x20] sm:$0xff]
    %v188 = vld [vmem:[#allocation5 + $0x28] sm:$0xff]
    %v189 = vld [vmem:[#allocation5 + $0x30] sm:$0xff]
    %v190 = vld [vmem:[#allocation5 + $0x38] sm:$0xff]
    %v191 = vld [vmem:[#allocation5 + $0x40] sm:$0xff]
    %v192 = vld [vmem:[#allocation5 + $0x48] sm:$0xff]
    %v193 = vld [vmem:[#allocation5 + $0x50] sm:$0xff]
    %v194 = vld [vmem:[#allocation5 + $0x58] sm:$0xff]
    %v195 = vld [vmem:[#allocation5 + $0x60] sm:$0xff]
    %v196 = vld [vmem:[#allocation5 + $0x68] sm:$0xff]
    %v197 = vld [vmem:[#allocation5 + $0x70] sm:$0xff]
    %v198 = vld [vmem:[#allocation5 + $0x78] sm:$0xff]
    %v199 = vld [vmem:[#allocation5 + $0x80] sm:$0xff]
    %v200 = vld [vmem:[#allocation5 + $0x88] sm:$0xff]
    %v201 = vld [vmem:[#allocation5 + $0x90] sm:$0xff]
    %v202 = vld [vmem:[#allocation5 + $0x98] sm:$0xff]
    %v203 = vld [vmem:[#allocation5 + $0xa0] sm:$0xff]
    %v204 = vld [vmem:[#allocation5 + $0xa8] sm:$0xff]
    %v205 = vld [vmem:[#allocation5 + $0xb0] sm:$0xff]
    %v206 = vld [vmem:[#allocation5 + $0xb8] sm:$0xff]
    %v207 = vld [vmem:[#allocation5 + $0xc0] sm:$0xff]
    %v208 = vld [vmem:[#allocation5 + $0xc8] sm:$0xff]
    %v209 = vld [vmem:[#allocation5 + $0xd0] sm:$0xff]
    %v210 = vld [vmem:[#allocation5 + $0xd8] sm:$0xff]
    %v211 = vld [vmem:[#allocation5 + $0xe0] sm:$0xff]
    %v212 = vld [vmem:[#allocation5 + $0xe8] sm:$0xff]
    %v213 = vld [vmem:[#allocation5 + $0xf0] sm:$0xff]
    %v214 = vld [vmem:[#allocation5 + $0xf8] sm:$0xff]
    %v215 = vld [vmem:[#allocation5 + $0x100] sm:$0xff]
    %v216 = vld [vmem:[#allocation5 + $0x108] sm:$0xff]
    %v217 = vld [vmem:[#allocation5 + $0x110] sm:$0xff]
    %v218 = vld [vmem:[#allocation5 + $0x118] sm:$0xff]
    %v219 = vld [vmem:[#allocation5 + $0x120] sm:$0xff]
    %v220 = vld [vmem:[#allocation5 + $0x128] sm:$0xff]
    %v221 = vld [vmem:[#allocation5 + $0x130] sm:$0xff]
    %v222 = vld [vmem:[#allocation5 + $0x138] sm:$0xff]
    %v223 = vld [vmem:[#allocation5 + $0x140] sm:$0xff]
    %v224 = vld [vmem:[#allocation5 + $0x148] sm:$0xff]
    %v225 = vld [vmem:[#allocation5 + $0x150] sm:$0xff]
    %v226 = vld [vmem:[#allocation5 + $0x158] sm:$0xff]
    %v227 = vld [vmem:[#allocation5 + $0x160] sm:$0xff]
    %v228 = vld [vmem:[#allocation5 + $0x168] sm:$0xff]
    %v229 = vld [vmem:[#allocation5 + $0x170] sm:$0xff]
    %v230 = vld [vmem:[#allocation5 + $0x178] sm:$0xff]
    %v231 = vld [vmem:[#allocation5 + $0x180] sm:$0xff]
    %v232 = vld [vmem:[#allocation5 + $0x188] sm:$0xff]
    %v233 = vld [vmem:[#allocation5 + $0x190] sm:$0xff]
    %v234 = vld [vmem:[#allocation5 + $0x198] sm:$0xff]
    %v235 = vld [vmem:[#allocation5 + $0x1a0] sm:$0xff]
    %v236 = vld [vmem:[#allocation5 + $0x1a8] sm:$0xff]
    %v237 = vld [vmem:[#allocation5 + $0x1b0] sm:$0xff]
    %v238 = vld [vmem:[#allocation5 + $0x1b8] sm:$0xff]
    %v239 = vld [vmem:[#allocation5 + $0x1c0] sm:$0xff]
    %v240 = vld [vmem:[#allocation5 + $0x1c8] sm:$0xff]
    %v241 = vld [vmem:[#allocation5 + $0x1d0] sm:$0xff]
    %v242 = vld [vmem:[#allocation5 + $0x1d8] sm:$0xff]
    %v243 = vld [vmem:[#allocation5 + $0x1e0] sm:$0xff]
    %v244 = vld [vmem:[#allocation5 + $0x1e8] sm:$0xff]
    %v245 = vld [vmem:[#allocation5 + $0x1f0] sm:$0xff]
    %v246 = vld [vmem:[#allocation5 + $0x1f8] sm:$0xff]
    %v247 = vld [vmem:[#allocation5 + $0x200] sm:$0xff]
    %v248 = vld [vmem:[#allocation5 + $0x208] sm:$0xff]
    %v249 = vld [vmem:[#allocation5 + $0x210] sm:$0xff]
    %v250 = vld [vmem:[#allocation5 + $0x218] sm:$0xff]
    %v251 = vld [vmem:[#allocation5 + $0x220] sm:$0xff]
    %v252 = vld [vmem:[#allocation5 + $0x228] sm:$0xff]
    %v253 = vld [vmem:[#allocation5 + $0x230] sm:$0xff]
    %v254 = vld [vmem:[#allocation5 + $0x238] sm:$0xff]
    %v255 = vld [vmem:[#allocation5 + $0x240] sm:$0xff]
    %v256 = vld [vmem:[#allocation5 + $0x248] sm:$0xff]
    %v257 = vld [vmem:[#allocation5 + $0x250] sm:$0xff]
    %v258 = vld [vmem:[#allocation5 + $0x258] sm:$0xff]
    %v259 = vld [vmem:[#allocation5 + $0x260] sm:$0xff]
    %v260 = vld [vmem:[#allocation5 + $0x268] sm:$0xff]
    %v261 = vld [vmem:[#allocation5 + $0x270] sm:$0xff]
    %v262 = vld [vmem:[#allocation5 + $0x278] sm:$0xff]
    %v263 = vld [vmem:[#allocation5 + $0x280] sm:$0xff]
    %v264 = vld [vmem:[#allocation5 + $0x288] sm:$0xff]
    %v265 = vld [vmem:[#allocation5 + $0x290] sm:$0xff]
    %v266 = vld [vmem:[#allocation5 + $0x298] sm:$0xff]
    %v267 = vld [vmem:[#allocation5 + $0x2a0] sm:$0xff]
    %v268 = vld [vmem:[#allocation5 + $0x2a8] sm:$0xff]
    %v269 = vld [vmem:[#allocation5 + $0x2b0] sm:$0xff]
    %v270 = vld [vmem:[#allocation5 + $0x2b8] sm:$0xff]
    %v271 = vld [vmem:[#allocation5 + $0x2c0] sm:$0xff]
    %v272 = vld [vmem:[#allocation5 + $0x2c8] sm:$0xff]
    %v273 = vld [vmem:[#allocation5 + $0x2d0] sm:$0xff]
    %v274 = vld [vmem:[#allocation5 + $0x2d8] sm:$0xff]
    %v275 = vld [vmem:[#allocation5 + $0x2e0] sm:$0xff]
    %v276 = vld [vmem:[#allocation5 + $0x2e8] sm:$0xff]
    %v277 = vld [vmem:[#allocation5 + $0x2f0] sm:$0xff]
    %v278 = vld [vmem:[#allocation5 + $0x2f8] sm:$0xff]
    %v279 = vld [vmem:[#allocation5 + $0x300] sm:$0xff]
    %v280 = vld [vmem:[#allocation5 + $0x308] sm:$0xff]
    %v281 = vld [vmem:[#allocation5 + $0x310] sm:$0xff]
    %v282 = vld [vmem:[#allocation5 + $0x318] sm:$0xff]
    %v283 = vld [vmem:[#allocation5 + $0x320] sm:$0xff]
    %v284 = vld [vmem:[#allocation5 + $0x328] sm:$0xff]
    %v285 = vld [vmem:[#allocation5 + $0x330] sm:$0xff]
    %v286 = vld [vmem:[#allocation5 + $0x338] sm:$0xff]
    %v287 = vld [vmem:[#allocation5 + $0x340] sm:$0xff]
    %v288 = vld [vmem:[#allocation5 + $0x348] sm:$0xff]
    %v289 = vld [vmem:[#allocation5 + $0x350] sm:$0xff]
    %v290 = vld [vmem:[#allocation5 + $0x358] sm:$0xff]
    %v291 = vld [vmem:[#allocation5 + $0x360] sm:$0xff]
    %v292 = vld [vmem:[#allocation5 + $0x368] sm:$0xff]
    %v293 = vld [vmem:[#allocation5 + $0x370] sm:$0xff]
    %v294 = vld [vmem:[#allocation5 + $0x378] sm:$0xff]
    %v295 = vld [vmem:[#allocation5 + $0x380] sm:$0xff]
    %v296 = vld [vmem:[#allocation5 + $0x388] sm:$0xff]
    %v297 = vld [vmem:[#allocation5 + $0x390] sm:$0xff]
    %v298 = vld [vmem:[#allocation5 + $0x398] sm:$0xff]
    %v299 = vld [vmem:[#allocation5 + $0x3a0] sm:$0xff]
    %v300 = vld [vmem:[#allocation5 + $0x3a8] sm:$0xff]
    %v301 = vld [vmem:[#allocation5 + $0x3b0] sm:$0xff]
    %v302 = vld [vmem:[#allocation5 + $0x3b8] sm:$0xff]
    %v303 = vld [vmem:[#allocation5 + $0x3c0] sm:$0xff]
    %v304 = vld [vmem:[#allocation5 + $0x3c8] sm:$0xff]
    %v305 = vld [vmem:[#allocation5 + $0x3d0] sm:$0xff]
    %v306 = vld [vmem:[#allocation5 + $0x3d8] sm:$0xff]
    %v307 = vld [vmem:[#allocation5 + $0x3e0] sm:$0xff]
    %v308 = vld [vmem:[#allocation5 + $0x3e8] sm:$0xff]
    %v309 = vld [vmem:[#allocation5 + $0x3f0] sm:$0xff]
    %v310 = vld [vmem:[#allocation5 + $0x3f8] sm:$0xff]
    %v311 = vld [vmem:[#allocation5 + $0x400] sm:$0xff]
    %v312 = vld [vmem:[#allocation5 + $0x408] sm:$0xff]
    %v313 = vld [vmem:[#allocation5 + $0x410] sm:$0xff]
    %v314 = vld [vmem:[#allocation5 + $0x418] sm:$0xff]
    %v315 = vld [vmem:[#allocation5 + $0x420] sm:$0xff]
    %v316 = vld [vmem:[#allocation5 + $0x428] sm:$0xff]
    %v317 = vld [vmem:[#allocation5 + $0x430] sm:$0xff]
    %v318 = vld [vmem:[#allocation5 + $0x438] sm:$0xff]
    %v319 = vld [vmem:[#allocation5 + $0x440] sm:$0xff]
    %v320 = vld [vmem:[#allocation5 + $0x448] sm:$0xff]
    %v321 = vld [vmem:[#allocation5 + $0x450] sm:$0xff]
    %v322 = vld [vmem:[#allocation5 + $0x458] sm:$0xff]
    %v323 = vld [vmem:[#allocation5 + $0x460] sm:$0xff]
    %v324 = vld [vmem:[#allocation5 + $0x468] sm:$0xff]
    %v325 = vld [vmem:[#allocation5 + $0x470] sm:$0xff]
    %v326 = vld [vmem:[#allocation5 + $0x478] sm:$0xff]
    %v327 = vld [vmem:[#allocation5 + $0x480] sm:$0xff]
    %v328 = vld [vmem:[#allocation5 + $0x488] sm:$0xff]
    %v329 = vld [vmem:[#allocation5 + $0x490] sm:$0xff]
    %v330 = vld [vmem:[#allocation5 + $0x498] sm:$0xff]
    %v331 = vld [vmem:[#allocation5 + $0x4a0] sm:$0xff]
    %v332 = vld [vmem:[#allocation5 + $0x4a8] sm:$0xff]
    %v333 = vld [vmem:[#allocation5 + $0x4b0] sm:$0xff]
    %v334 = vld [vmem:[#allocation5 + $0x4b8] sm:$0xff]
    %v335 = vld [vmem:[#allocation5 + $0x4c0] sm:$0xff]
    %v336 = vld [vmem:[#allocation5 + $0x4c8] sm:$0xff]
    %v337 = vld [vmem:[#allocation5 + $0x4d0] sm:$0xff]
    %v338 = vld [vmem:[#allocation5 + $0x4d8] sm:$0xff]
    %v339 = vld [vmem:[#allocation5 + $0x4e0] sm:$0xff]
    %v340 = vld [vmem:[#allocation5 + $0x4e8] sm:$0xff]
    %v341 = vld [vmem:[#allocation5 + $0x4f0] sm:$0xff]
    %v342 = vld [vmem:[#allocation5 + $0x4f8] sm:$0xff]
    %v343 = vld [vmem:[#allocation5 + $0x500] sm:$0xff]
    %v344 = vld [vmem:[#allocation5 + $0x508] sm:$0xff]
    %v345 = vld [vmem:[#allocation5 + $0x510] sm:$0xff]
    %v346 = vld [vmem:[#allocation5 + $0x518] sm:$0xff]
    %v347 = vld [vmem:[#allocation5 + $0x520] sm:$0xff]
    %v348 = vld [vmem:[#allocation5 + $0x528] sm:$0xff]
    %v349 = vld [vmem:[#allocation5 + $0x530] sm:$0xff]
    %v350 = vld [vmem:[#allocation5 + $0x538] sm:$0xff]
    %v351 = vld [vmem:[#allocation5 + $0x540] sm:$0xff]
    %v352 = vld [vmem:[#allocation5 + $0x548] sm:$0xff]
    %v353 = vld [vmem:[#allocation5 + $0x550] sm:$0xff]
    %v354 = vld [vmem:[#allocation5 + $0x558] sm:$0xff]
    %v355 = vld [vmem:[#allocation5 + $0x560] sm:$0xff]
    %v356 = vld [vmem:[#allocation5 + $0x568] sm:$0xff]
    %v357 = vld [vmem:[#allocation5 + $0x570] sm:$0xff]
    %v358 = vld [vmem:[#allocation5 + $0x578] sm:$0xff]
    %v359 = vld [vmem:[#allocation5 + $0x580] sm:$0xff]
    %v360 = vld [vmem:[#allocation5 + $0x588] sm:$0xff]
    %v361 = vld [vmem:[#allocation5 + $0x590] sm:$0xff]
    %v362 = vld [vmem:[#allocation5 + $0x598] sm:$0xff]
    %v363 = vld [vmem:[#allocation5 + $0x5a0] sm:$0xff]
    %v364 = vld [vmem:[#allocation5 + $0x5a8] sm:$0xff]
    %v365 = vld [vmem:[#allocation5 + $0x5b0] sm:$0xff]
    %v366 = vld [vmem:[#allocation5 + $0x5b8] sm:$0xff]
    %v367 = vld [vmem:[#allocation5 + $0x5c0] sm:$0xff]
    %v368 = vld [vmem:[#allocation5 + $0x5c8] sm:$0xff]
    %v369 = vld [vmem:[#allocation5 + $0x5d0] sm:$0xff]
    %v370 = vld [vmem:[#allocation5 + $0x5d8] sm:$0xff]
    %v371 = vld [vmem:[#allocation5 + $0x5e0] sm:$0xff]
    %v372 = vld [vmem:[#allocation5 + $0x5e8] sm:$0xff]
    %v373 = vld [vmem:[#allocation5 + $0x5f0] sm:$0xff]
    %v374 = vld [vmem:[#allocation5 + $0x5f8] sm:$0xff]
    %v375 = vld [vmem:[%s4] sm:$0x7]
    %v377 = vperm.slane %v375, 0
    %v378 = vperm.slane %v375, 1
    %v379 = vperm.slane %v375, 2
    %383 = vmatpush.msra.mxu0 %v228
    %384 = vmatpush.msra.mxu0 %v225
    %385 = vmatpush.msra.mxu0 %v222
    %386 = vmatpush.msra.mxu0 %v219
    %387 = vmatpush.msra.mxu0 %v216
    %388 = vmatpush.msra.mxu0 %v213
    %389 = vmatpush.msra.mxu0 %v210
    %390 = vmatpush.msra.mxu0 %v207
    %391 = vmatpush.msra.mxu0 %v204
    %392 = vmatpush.msra.mxu0 %v201
    %393 = vmatpush.msra.mxu0 %v198
    %394 = vmatpush.msra.mxu0 %v195
    %395 = vmatpush.msra.mxu0 %v192
    %396 = vmatpush.msra.mxu0 %v189
    %397 = vmatpush.msra.mxu0 %v186
    %398 = vmatpush.msra.mxu0 %v183
    %399 = vmatmul.f32.gmra.mxu0 %v179
    %v400 = vpop.f32.mrf.mxu0
    %v401 = vadd.f32 %v377, %v400
    %402 = vdwg.mxu0
    %403 = vmatpush.msra.mxu0 %v276
    %404 = vmatpush.msra.mxu0 %v273
    %405 = vmatpush.msra.mxu0 %v270
    %406 = vmatpush.msra.mxu0 %v267
    %407 = vmatpush.msra.mxu0 %v264
    %408 = vmatpush.msra.mxu0 %v261
    %409 = vmatpush.msra.mxu0 %v258
    %410 = vmatpush.msra.mxu0 %v255
    %411 = vmatpush.msra.mxu0 %v252
    %412 = vmatpush.msra.mxu0 %v249
    %413 = vmatpush.msra.mxu0 %v246
    %414 = vmatpush.msra.mxu0 %v243
    %415 = vmatpush.msra.mxu0 %v240
    %416 = vmatpush.msra.mxu0 %v237
    %417 = vmatpush.msra.mxu0 %v234
    %418 = vmatpush.msra.mxu0 %v231
    %419 = vmatmul.f32.gmra.mxu0 %v180
    %v420 = vpop.f32.mrf.mxu0
    %v421 = vadd.f32 %v401, %v420
    %422 = vdwg.mxu0
    %423 = vmatpush.msra.mxu0 %v324
    %424 = vmatpush.msra.mxu0 %v321
    %425 = vmatpush.msra.mxu0 %v318
    %426 = vmatpush.msra.mxu0 %v315
    %427 = vmatpush.msra.mxu0 %v312
    %428 = vmatpush.msra.mxu0 %v309
    %429 = vmatpush.msra.mxu0 %v306
    %430 = vmatpush.msra.mxu0 %v303
    %431 = vmatpush.msra.mxu0 %v300
    %432 = vmatpush.msra.mxu0 %v297
    %433 = vmatpush.msra.mxu0 %v294
    %434 = vmatpush.msra.mxu0 %v291
    %435 = vmatpush.msra.mxu0 %v288
    %436 = vmatpush.msra.mxu0 %v285
    %437 = vmatpush.msra.mxu0 %v282
    %438 = vmatpush.msra.mxu0 %v279
    %439 = vmatmul.f32.gmra.mxu0 %v181
    %v440 = vpop.f32.mrf.mxu0
    %v441 = vadd.f32 %v421, %v440
    %442 = vdwg.mxu0
    %443 = vmatpush.msra.mxu0 %v372
    %444 = vmatpush.msra.mxu0 %v369
    %445 = vmatpush.msra.mxu0 %v366
    %446 = vmatpush.msra.mxu0 %v363
    %447 = vmatpush.msra.mxu0 %v360
    %448 = vmatpush.msra.mxu0 %v357
    %449 = vmatpush.msra.mxu0 %v354
    %450 = vmatpush.msra.mxu0 %v351
    %451 = vmatpush.msra.mxu0 %v348
    %452 = vmatpush.msra.mxu0 %v345
    %453 = vmatpush.msra.mxu0 %v342
    %454 = vmatpush.msra.mxu0 %v339
    %455 = vmatpush.msra.mxu0 %v336
    %456 = vmatpush.msra.mxu0 %v333
    %457 = vmatpush.msra.mxu0 %v330
    %458 = vmatpush.msra.mxu0 %v327
    %459 = vmatmul.f32.gmra.mxu0 %v182
    %v460 = vpop.f32.mrf.mxu0
    %v461 = vadd.f32 %v441, %v460
    %462 = vdwg.mxu0
    %463 = vmatpush.msra.mxu0 %v229
    %464 = vmatpush.msra.mxu0 %v226
    %465 = vmatpush.msra.mxu0 %v223
    %466 = vmatpush.msra.mxu0 %v220
    %467 = vmatpush.msra.mxu0 %v217
    %468 = vmatpush.msra.mxu0 %v214
    %469 = vmatpush.msra.mxu0 %v211
    %470 = vmatpush.msra.mxu0 %v208
    %471 = vmatpush.msra.mxu0 %v205
    %472 = vmatpush.msra.mxu0 %v202
    %473 = vmatpush.msra.mxu0 %v199
    %474 = vmatpush.msra.mxu0 %v196
    %475 = vmatpush.msra.mxu0 %v193
    %476 = vmatpush.msra.mxu0 %v190
    %477 = vmatpush.msra.mxu0 %v187
    %478 = vmatpush.msra.mxu0 %v184
    %479 = vmatmul.f32.gmra.mxu0 %v179
    %v480 = vpop.f32.mrf.mxu0
    %v481 = vadd.f32 %v378, %v480
    %482 = vdwg.mxu0
    %483 = vmatpush.msra.mxu0 %v277
    %484 = vmatpush.msra.mxu0 %v274
    %485 = vmatpush.msra.mxu0 %v271
    %486 = vmatpush.msra.mxu0 %v268
    %487 = vmatpush.msra.mxu0 %v265
    %488 = vmatpush.msra.mxu0 %v262
    %489 = vmatpush.msra.mxu0 %v259
    %490 = vmatpush.msra.mxu0 %v256
    %491 = vmatpush.msra.mxu0 %v253
    %492 = vmatpush.msra.mxu0 %v250
    %493 = vmatpush.msra.mxu0 %v247
    %494 = vmatpush.msra.mxu0 %v244
    %495 = vmatpush.msra.mxu0 %v241
    %496 = vmatpush.msra.mxu0 %v238
    %497 = vmatpush.msra.mxu0 %v235
    %498 = vmatpush.msra.mxu0 %v232
    %499 = vmatmul.f32.gmra.mxu0 %v180
    %v500 = vpop.f32.mrf.mxu0
    %v501 = vadd.f32 %v481, %v500
    %502 = vdwg.mxu0
    %503 = vmatpush.msra.mxu0 %v325
    %504 = vmatpush.msra.mxu0 %v322
    %505 = vmatpush.msra.mxu0 %v319
    %506 = vmatpush.msra.mxu0 %v316
    %507 = vmatpush.msra.mxu0 %v313
    %508 = vmatpush.msra.mxu0 %v310
    %509 = vmatpush.msra.mxu0 %v307
    %510 = vmatpush.msra.mxu0 %v304
    %511 = vmatpush.msra.mxu0 %v301
    %512 = vmatpush.msra.mxu0 %v298
    %513 = vmatpush.msra.mxu0 %v295
    %514 = vmatpush.msra.mxu0 %v292
    %515 = vmatpush.msra.mxu0 %v289
    %516 = vmatpush.msra.mxu0 %v286
    %517 = vmatpush.msra.mxu0 %v283
    %518 = vmatpush.msra.mxu0 %v280
    %519 = vmatmul.f32.gmra.mxu0 %v181
    %v520 = vpop.f32.mrf.mxu0
    %v521 = vadd.f32 %v501, %v520
    %522 = vdwg.mxu0
    %523 = vmatpush.msra.mxu0 %v373
    %524 = vmatpush.msra.mxu0 %v370
    %525 = vmatpush.msra.mxu0 %v367
    %526 = vmatpush.msra.mxu0 %v364
    %527 = vmatpush.msra.mxu0 %v361
    %528 = vmatpush.msra.mxu0 %v358
    %529 = vmatpush.msra.mxu0 %v355
    %530 = vmatpush.msra.mxu0 %v352
    %531 = vmatpush.msra.mxu0 %v349
    %532 = vmatpush.msra.mxu0 %v346
    %533 = vmatpush.msra.mxu0 %v343
    %534 = vmatpush.msra.mxu0 %v340
    %535 = vmatpush.msra.mxu0 %v337
    %536 = vmatpush.msra.mxu0 %v334
    %537 = vmatpush.msra.mxu0 %v331
    %538 = vmatpush.msra.mxu0 %v328
    %539 = vmatmul.f32.gmra.mxu0 %v182
    %v540 = vpop.f32.mrf.mxu0
    %v541 = vadd.f32 %v521, %v540
    %542 = vdwg.mxu0
    %543 = vmatpush.msra.mxu0 %v230
    %544 = vmatpush.msra.mxu0 %v227
    %545 = vmatpush.msra.mxu0 %v224
    %546 = vmatpush.msra.mxu0 %v221
    %547 = vmatpush.msra.mxu0 %v218
    %548 = vmatpush.msra.mxu0 %v215
    %549 = vmatpush.msra.mxu0 %v212
    %550 = vmatpush.msra.mxu0 %v209
    %551 = vmatpush.msra.mxu0 %v206
    %552 = vmatpush.msra.mxu0 %v203
    %553 = vmatpush.msra.mxu0 %v200
    %554 = vmatpush.msra.mxu0 %v197
    %555 = vmatpush.msra.mxu0 %v194
    %556 = vmatpush.msra.mxu0 %v191
    %557 = vmatpush.msra.mxu0 %v188
    %558 = vmatpush.msra.mxu0 %v185
    %559 = vmatmul.f32.gmra.mxu0 %v179
    %v560 = vpop.f32.mrf.mxu0
    %v561 = vadd.f32 %v379, %v560
    %562 = vdwg.mxu0
    %563 = vmatpush.msra.mxu0 %v278
    %564 = vmatpush.msra.mxu0 %v275
    %565 = vmatpush.msra.mxu0 %v272
    %566 = vmatpush.msra.mxu0 %v269
    %567 = vmatpush.msra.mxu0 %v266
    %568 = vmatpush.msra.mxu0 %v263
    %569 = vmatpush.msra.mxu0 %v260
    %570 = vmatpush.msra.mxu0 %v257
    %571 = vmatpush.msra.mxu0 %v254
    %572 = vmatpush.msra.mxu0 %v251
    %573 = vmatpush.msra.mxu0 %v248
    %574 = vmatpush.msra.mxu0 %v245
    %575 = vmatpush.msra.mxu0 %v242
    %576 = vmatpush.msra.mxu0 %v239
    %577 = vmatpush.msra.mxu0 %v236
    %578 = vmatpush.msra.mxu0 %v233
    %579 = vmatmul.f32.gmra.mxu0 %v180
    %v580 = vpop.f32.mrf.mxu0
    %v581 = vadd.f32 %v561, %v580
    %582 = vdwg.mxu0
    %583 = vmatpush.msra.mxu0 %v326
    %584 = vmatpush.msra.mxu0 %v323
    %585 = vmatpush.msra.mxu0 %v320
    %586 = vmatpush.msra.mxu0 %v317
    %587 = vmatpush.msra.mxu0 %v314
    %588 = vmatpush.msra.mxu0 %v311
    %589 = vmatpush.msra.mxu0 %v308
    %590 = vmatpush.msra.mxu0 %v305
    %591 = vmatpush.msra.mxu0 %v302
    %592 = vmatpush.msra.mxu0 %v299
    %593 = vmatpush.msra.mxu0 %v296
    %594 = vmatpush.msra.mxu0 %v293
    %595 = vmatpush.msra.mxu0 %v290
    %596 = vmatpush.msra.mxu0 %v287
    %597 = vmatpush.msra.mxu0 %v284
    %598 = vmatpush.msra.mxu0 %v281
    %599 = vmatmul.f32.gmra.mxu0 %v181
    %v600 = vpop.f32.mrf.mxu0
    %v601 = vadd.f32 %v581, %v600
    %602 = vdwg.mxu0
    %603 = vmatpush.msra.mxu0 %v374
    %604 = vmatpush.msra.mxu0 %v371
    %605 = vmatpush.msra.mxu0 %v368
    %606 = vmatpush.msra.mxu0 %v365
    %607 = vmatpush.msra.mxu0 %v362
    %608 = vmatpush.msra.mxu0 %v359
    %609 = vmatpush.msra.mxu0 %v356
    %610 = vmatpush.msra.mxu0 %v353
    %611 = vmatpush.msra.mxu0 %v350
    %612 = vmatpush.msra.mxu0 %v347
    %613 = vmatpush.msra.mxu0 %v344
    %614 = vmatpush.msra.mxu0 %v341
    %615 = vmatpush.msra.mxu0 %v338
    %616 = vmatpush.msra.mxu0 %v335
    %617 = vmatpush.msra.mxu0 %v332
    %618 = vmatpush.msra.mxu0 %v329
    %619 = vmatmul.f32.gmra.mxu0 %v182
    %v620 = vpop.f32.mrf.mxu0
    %v621 = vadd.f32 %v601, %v620
    %622 = vdwg.mxu0
    %v623 = vmax.f32 %v461, 0.0
    %v624 = vmax.f32 %v541, 0.0
    %v625 = vmax.f32 %v621, 0.0
    %v626 = vld [vmem:[%s5] sm:$0x7]
    %v628 = vperm.slane %v626, 0
    %v629 = vperm.slane %v626, 1
    %v630 = vperm.slane %v626, 2
    %v634 = vmul.f32 %v623, %v628
    %v635 = vmul.f32 %v624, %v629
    %v636 = vmul.f32 %v625, %v630
    %v637 = vadd.f32 %v634, %v635
    %v638 = vadd.f32 %v637, %v636
    %639 = vadd.xlane.f32.xlu0 %v638
    %v640 = vpop.xlane.xlu0 %639
    %641 = vxpose.xlu0.b32.start [1/16] %v640, 128
    %642 = vxpose.xlu0.b32.cont [2/16] 0.0, 128
    %643 = vxpose.xlu0.b32.cont [3/16] 0.0, 128
    %644 = vxpose.xlu0.b32.cont [4/16] 0.0, 128
    %645 = vxpose.xlu0.b32.cont [5/16] 0.0, 128
    %646 = vxpose.xlu0.b32.cont [6/16] 0.0, 128
    %647 = vxpose.xlu0.b32.cont [7/16] 0.0, 128
    %648 = vxpose.xlu0.b32.cont [8/16] 0.0, 128
    %649 = vxpose.xlu0.b32.cont [9/16] 0.0, 128
    %650 = vxpose.xlu0.b32.cont [10/16] 0.0, 128
    %651 = vxpose.xlu0.b32.cont [11/16] 0.0, 128
    %652 = vxpose.xlu0.b32.cont [12/16] 0.0, 128
    %653 = vxpose.xlu0.b32.cont [13/16] 0.0, 128
    %654 = vxpose.xlu0.b32.cont [14/16] 0.0, 128
    %655 = vxpose.xlu0.b32.cont [15/16] 0.0, 128
    %656 = vxpose.xlu0.b32.end [16/16] 0.0, 128
    %v657 = vpop.trf.xlu0
    %v658 = vpop.trf.xlu0
    %v659 = vpop.trf.xlu0
    %v660 = vpop.trf.xlu0
    %v661 = vpop.trf.xlu0
    %v662 = vpop.trf.xlu0
    %v663 = vpop.trf.xlu0
    %v664 = vpop.trf.xlu0
    %v665 = vpop.trf.xlu0
    %v666 = vpop.trf.xlu0
    %v667 = vpop.trf.xlu0
    %v668 = vpop.trf.xlu0
    %v669 = vpop.trf.xlu0
    %v670 = vpop.trf.xlu0
    %v671 = vpop.trf.xlu0
    %v672 = vpop.trf.xlu0
    %s673 = sld [smem:[#allocation2]]
    %v674 = vstv %s673
    %v675 = vadd.f32 %v657, %v674
    %vm676 = vcmask 57344
    %677 = vst.msk [vmem:[%s7] sm:$0x1] %vm676, %v675
    // Predicated region
    $region38: #{critic_forward.1} parent=1 // pred_check
      _
    $region39: #{critic_forward.1} parent=1 // pred_check_branch
      %679 = sbr.rel (0) target = $region41
    $region40: #{critic_forward.1} parent=1 // pred_region
      _
    $region41: #{critic_forward.1} parent=1 // pred_fallthru
      _
    // Predicated region
    $region42: #{critic_forward.1} parent=1 // pred_check
      _
    $region43: #{critic_forward.1} parent=1 // pred_check_branch
      %681 = sbr.rel (0) target = $region45
    $region44: #{critic_forward.1} parent=1 // pred_region
      _
    $region45: #{critic_forward.1} parent=1 // pred_fallthru
      _
    %682 = vsyncpa [#allocation4], 1
    %683 = vsyncpa [#allocation6], 1

</llo_original>
